<compile_context>
chip_gen: v5e
topology: v5e:2x2
jax: 0.10.0
libtpu: 0.0.40
codegen_flags: <defaults>
</compile_context>

<pallas_src>
import functools

import jax
import jax.numpy as jnp
import numpy as np
from jax.experimental import pallas as pl
from jax.experimental.pallas import tpu as pltpu


def _pe_add_kernel(x_ref, pe_ref, o_ref):
    """x_ref/o_ref: (TN, TF) flat tiles; pe_ref: (1, TF), broadcast over batch rows."""
    # Add in f32 (no-op casts for f32 inputs; cheap VPU filler otherwise — the
    # kernel is HBM-bandwidth bound), then cast once to the output dtype.
    o_ref[...] = (x_ref[...].astype(jnp.float32)
                  + pe_ref[...].astype(jnp.float32)).astype(o_ref.dtype)


@functools.lru_cache(maxsize=64)
def _get_pe_table(L, D, dtype_name):
    """Sinusoidal PE table [L, D], matching the PyTorch module exactly:
    PE(pos, 2i) = sin(pos / 10000^(2i/D)), PE(pos, 2i+1) = cos(pos / 10000^(2i/D)).
    Built once on the host and cached (per (L, D, dtype)) as a device array."""
    pe = np.zeros((L, D), dtype=np.float32)
    positions = np.arange(L, dtype=np.float32)[:, None]
    dividors = np.power(np.float32(10000.0),
                        np.arange(0, D, 2, dtype=np.float32) / np.float32(D))
    ang = positions / dividors
    pe[:, 0::2] = np.sin(ang)[:, : pe[:, 0::2].shape[1]]
    pe[:, 1::2] = np.cos(ang)[:, : pe[:, 1::2].shape[1]]
    return jnp.asarray(pe, dtype=dtype_name)


def _vmem_capacity_bytes():
    try:
        return int(pltpu.get_tpu_info().vmem_capacity_bytes)
    except Exception:
        return 64 << 20   # conservative default: v7x per-TensorCore VMEM


def _choose_tiles(N, F, itemsize, target_bytes):
    """Pick (TN, TF) so each x block moves ~target_bytes, with TF a multiple of
    128 (or the full extent F) and TN a multiple of 8 (or the full extent N)."""
    target_elems = max(int(target_bytes) // itemsize, 1024)
    TN = N if N <= 8 else 8
    per_row = max(target_elems // TN, 128)
    if F <= per_row:
        TF = F                      # full extent (legal even when F % 128 != 0)
        if N > TN:                  # fold more batch rows up to the byte target
            rows = (max(target_elems // max(F, 1), 8) // 8) * 8
            TN = N if rows >= N else rows
    else:
        TF = (per_row // 128) * 128  # lane-dense tile; boundary block is masked
    return TN, TF


def positional_encoding_add(x, max_length=5000):
    """Adds sinusoidal positional encoding to x of shape [N, L, D]."""
    N, L, D = x.shape
    assert L <= max_length

    pe = _get_pe_table(L, D, jnp.dtype(x.dtype).name)   # cached device table

    # Flatten (L, D) -> F so the lane axis is dense even for narrow / odd D.
    F = L * D
    x2 = x.reshape(N, F)
    pe2 = pe.reshape(1, F)

    itemsize = jnp.dtype(x.dtype).itemsize
    vmem_cap = _vmem_capacity_bytes()
    target_bytes = (8 << 20) if vmem_cap >= (96 << 20) else (4 << 20)
    TN, TF = _choose_tiles(N, F, itemsize, target_bytes)

    gf = pl.cdiv(F, TF)
    gn = pl.cdiv(N, TN)

    # Double-buffered x-in + out + pe blocks, 1.5x headroom, capped >=12 MiB
    # below the physical per-core VMEM.
    vmem_needed = 2 * (2 * TN * TF + TF) * itemsize
    vmem_limit = max(int(vmem_needed * 1.5) + (2 << 20), 16 << 20)
    vmem_limit = int(min(vmem_limit, vmem_cap - (12 << 20)))

    out = pl.pallas_call(
        _pe_add_kernel,
        out_shape=jax.ShapeDtypeStruct((N, F), x.dtype),
        grid_spec=pltpu.PrefetchScalarGridSpec(
            num_scalar_prefetch=0,
            # n is the inner (fastest) axis: the PE block index only depends on
            # f, so its tile stays resident in VMEM across the batch sweep.
            grid=(gf, gn),
            in_specs=[
                pl.BlockSpec((TN, TF), lambda f, n: (n, f)),   # x (flattened)
                pl.BlockSpec((1, TF), lambda f, n: (0, f)),    # pe (ignores n)
            ],
            out_specs=pl.BlockSpec((TN, TF), lambda f, n: (n, f)),
        ),
        compiler_params=pltpu.CompilerParams(
            # Both grid axes are fully independent elementwise work -> mark both
            # parallel so Mosaic can shard them across v7x's two TensorCores
            # even when one of them degenerates to size 1.
            dimension_semantics=("parallel", "parallel"),
            vmem_limit_bytes=vmem_limit,
        ),
    )(x2, pe2)

    return out.reshape(N, L, D)


def _reference_pe_add(x):
    """Pure-numpy reference matching the PyTorch module exactly."""
    N, L, D = x.shape
    pe = np.zeros((L, D), dtype=np.float32)
    positions = np.arange(L, dtype=np.float32)[:, None]
    dividors = np.power(10000.0, np.arange(0, D, 2, dtype=np.float32) / D)
    pe[:, 0::2] = np.sin(positions / dividors)
    pe[:, 1::2] = np.cos(positions / dividors)
    return np.asarray(x) + pe[None, :, :]


if __name__ == "__main__":
    key = jax.random.PRNGKey(0)
    N, L, D = 2, 8, 32  # small shapes consistent with a [N, L, D] input
    x = jax.random.normal(key, (N, L, D), dtype=jnp.float32)

    out = positional_encoding_add(x, max_length=5000)
    out = jax.block_until_ready(out)

    ref = _reference_pe_add(np.asarray(x))
    np.testing.assert_allclose(np.asarray(out), ref, rtol=1e-5, atol=1e-5)

    print("KERNEL_OK")
</pallas_src>

<mosaic_0001>
module attributes {stable_mosaic.version = 11 : i64} {
  func.func @_pe_add_kernel(%arg0: i32, %arg1: i32, %arg2: memref<2x256xf32, #tpu.memory_space<vmem>>, %arg3: memref<1x256xf32, #tpu.memory_space<vmem>>, %arg4: memref<2x256xf32, #tpu.memory_space<vmem>>) attributes {dimension_semantics = [#tpu.dimension_semantics<parallel>, #tpu.dimension_semantics<parallel>], iteration_bounds = array<i64: 1, 1>, scalar_prefetch = 0 : i64, scratch_operands = 0 : i64, tpu.core_type = #tpu.core_type<tc>, window_params = [{transform_indices = @transform_0, window_bounds = array<i64: 2, 256>}, {transform_indices = @transform_1, window_bounds = array<i64: 1, 256>}, {transform_indices = @transform_2, window_bounds = array<i64: 2, 256>}]} {
    %c0 = arith.constant 0 : index
    %c0_0 = arith.constant 0 : index
    %0 = vector.load %arg2[%c0, %c0_0] : memref<2x256xf32, #tpu.memory_space<vmem>>, vector<2x256xf32>
    %c0_1 = arith.constant 0 : index
    %c0_2 = arith.constant 0 : index
    %1 = vector.load %arg3[%c0_1, %c0_2] : memref<1x256xf32, #tpu.memory_space<vmem>>, vector<1x256xf32>
    %2 = vector.broadcast %1 : vector<1x256xf32> to vector<2x256xf32>
    %3 = arith.addf %0, %2 : vector<2x256xf32>
    %c0_3 = arith.constant 0 : index
    %c0_4 = arith.constant 0 : index
    %4 = vector.load %arg4[%c0_3, %c0_4] : memref<2x256xf32, #tpu.memory_space<vmem>>, vector<2x256xf32>
    tpu.vector_store %arg4[%c0_3, %c0_4], %3 {strides = array<i32>} : memref<2x256xf32, #tpu.memory_space<vmem>>, vector<2x256xf32>,
    return
  }
  func.func @transform_0(%arg0: i32, %arg1: i32) -> (i32, i32) {
    %c0_i32 = arith.constant 0 : i32
    return %arg1, %arg0 : i32, i32
  }
  func.func @transform_1(%arg0: i32, %arg1: i32) -> (i32, i32) {
    %c0_i32 = arith.constant 0 : i32
    %c0_i32_0 = arith.constant 0 : i32
    return %c0_i32, %arg0 : i32, i32
  }
  func.func @transform_2(%arg0: i32, %arg1: i32) -> (i32, i32) {
    %c0_i32 = arith.constant 0 : i32
    return %arg1, %arg0 : i32, i32
  }
}

</mosaic_0001>

<llo_original>
// kernel: tpu_custom_call.1
$region0: #{tpu_custom_call.1}
  #allocation0 [shape = 'u32[]', space=smem, size = 0x4, offset = 0x4, fixed_abs, tag = 'smem constant byte address 0x4 - core index']
  #allocation1 [shape = 'u32[72,128]{1,0:T(1,128)}', space=vmem, size = 0x9000, scoped, tag = 'internal scratch']
  %s0 = inlined_call_operand.hbm [shape: f32[2,256], index: 0, kind: input, shape index: {}]
  %s1 = inlined_call_operand.hbm [shape: f32[1,256], index: 1, kind: input, shape index: {}]
  %s2 = inlined_call_operand.hbm [shape: f32[2,256], index: 2, kind: output, shape index: {}]
  %s3 = sld [smem:[#allocation0]]
  $region26: #{tpu_custom_call.1} parent=0
    _
  %s5 = ssub.s32 1, %s3
  %s6 = scalar_select 0, %s5, %s3
  $region1: #{tpu_custom_call.1} parent=0
    #allocation2 [shape = 'u8[2048]{0}', space=vmem, size = 0x800, scoped, tag = 'input window, operand 0, single buffered']
    #allocation3 [shape = 's32[1]{0}', space=sflag, size = 0x4, scoped, tag = 'scoped memory for tpu_custom_call.1']
    #allocation4 [shape = 's32[1]{0}', space=sflag, size = 0x4, scoped, tag = 'scoped memory for tpu_custom_call.1']
    #allocation5 [shape = 'u8[1024]{0}', space=vmem, size = 0x400, scoped, tag = 'input window, operand 1, single buffered']
    #allocation6 [shape = 's32[1]{0}', space=sflag, size = 0x4, scoped, tag = 'scoped memory for tpu_custom_call.1']
    #allocation7 [shape = 'u8[2048]{0}', space=vmem, size = 0x800, scoped, tag = 'output window, operand 0, single buffered']
    %7 = vsyncpa [#allocation3], 0
    %8 = vsyncpa [#allocation6], 0
    %9 = vsyncpa [#allocation4], 0
    // Predicated region
    $region2: #{tpu_custom_call.1} parent=1 // pred_check
      _
    $region3: #{tpu_custom_call.1} parent=1 // pred_check_branch
      %11 = sbr.rel (0) target = $region5
    $region4: #{tpu_custom_call.1} parent=1 // pred_region
      %13 = vsyncadd [#allocation3], 0
      %s15 = sshll.u32 %s0, 4
      %s16 = int_to_ptr.hbm [resolvable:$true] %s15
      %s17 = sshll.u32 [#allocation2], 4
      %s18 = int_to_ptr.vmem [resolvable:$true] %s17
      %20 = dma.hbm_to_vmem [thread:$0]  %s16, 64, %s18, [#allocation3]
    $region5: #{tpu_custom_call.1} parent=1 // pred_fallthru
      _
    // Predicated region
    $region6: #{tpu_custom_call.1} parent=1 // pred_check
      _
    $region7: #{tpu_custom_call.1} parent=1 // pred_check_branch
      %22 = sbr.rel (0) target = $region9
    $region8: #{tpu_custom_call.1} parent=1 // pred_region
      %24 = vsyncadd [#allocation6], 0
      %s26 = sshll.u32 %s1, 4
      %s27 = int_to_ptr.hbm [resolvable:$true] %s26
      %s28 = sshll.u32 [#allocation5], 4
      %s29 = int_to_ptr.vmem [resolvable:$true] %s28
      %31 = dma.hbm_to_vmem [thread:$0]  %s27, 32, %s29, [#allocation6]
    $region9: #{tpu_custom_call.1} parent=1 // pred_fallthru
      _
    // Predicated region
    $region10: #{tpu_custom_call.1} parent=1 // pred_check
      _
    $region11: #{tpu_custom_call.1} parent=1 // pred_check_branch
      %33 = sbr.rel (0) target = $region13
    $region12: #{tpu_custom_call.1} parent=1 // pred_region
      %35 = dma.done [#allocation3], 64
    $region13: #{tpu_custom_call.1} parent=1 // pred_fallthru
      _
    // Predicated region
    $region14: #{tpu_custom_call.1} parent=1 // pred_check
      _
    $region15: #{tpu_custom_call.1} parent=1 // pred_check_branch
      %37 = sbr.rel (0) target = $region17
    $region16: #{tpu_custom_call.1} parent=1 // pred_region
      %39 = dma.done [#allocation6], 32
    $region17: #{tpu_custom_call.1} parent=1 // pred_fallthru
      _
    %v40 = vld [vmem:[#allocation2] sm:$0xf]
    %v41 = vld [vmem:[#allocation5] sm:$0x3]
    %v43 = vperm.slane %v41, 0
    %v44 = vperm.slane %v41, 1
    %v45 = vrot.slane %v44, 6
    %vm46 = vcmask 1041408
    %v47 = vsel %vm46, %v43, %v45
    %v49 = vadd.f32 %v40, %v47
    %50 = vst [vmem:[#allocation7] sm:$0xf] %v49
    // Predicated region
    $region18: #{tpu_custom_call.1} parent=1 // pred_check
      _
    $region19: #{tpu_custom_call.1} parent=1 // pred_check_branch
      %52 = sbr.rel (0) target = $region21
    $region20: #{tpu_custom_call.1} parent=1 // pred_region
      %54 = vsyncadd [#allocation4], 0
      %s56 = sshll.u32 [#allocation7], 4
      %s57 = int_to_ptr.vmem [resolvable:$true] %s56
      %s58 = sshll.u32 %s2, 4
      %s59 = int_to_ptr.hbm [resolvable:$true] %s58
      %61 = dma.vmem_to_hbm [thread:$0]  %s57, 64, %s59, [#allocation4]
    $region21: #{tpu_custom_call.1} parent=1 // pred_fallthru
      _
    // Predicated region
    $region22: #{tpu_custom_call.1} parent=1 // pred_check
      _
    $region23: #{tpu_custom_call.1} parent=1 // pred_check_branch
      %63 = sbr.rel (0) target = $region25
    $region24: #{tpu_custom_call.1} parent=1 // pred_region
      %65 = dma.done [#allocation4], 64
    $region25: #{tpu_custom_call.1} parent=1 // pred_fallthru
      _
    %66 = vsyncpa [#allocation3], 1
    %67 = vsyncpa [#allocation6], 1
    %68 = vsyncpa [#allocation4], 1

</llo_original>
